<compile_context>
chip_gen: v7x
topology: tpu7x:2x2x1
jax: 0.10.0
libtpu: 0.0.40
codegen_flags: <defaults>
</compile_context>

<pallas_src>
import functools

import jax
import jax.numpy as jnp
from jax.experimental import pallas as pl
from jax.experimental.pallas import tpu as pltpu

BN_EPS = 1e-5
LANE = 128


# ---------------------------------------------------------------------------
# Fused single-call kernel (small batches): everything resident in VMEM.
# ---------------------------------------------------------------------------
def actor_fused_kernel(x_ref, w1_ref, slab_ref, w2_ref, w3_ref, out_ref,
                       *, f1, f2, a_pad):
    # Static, lane-aligned slices of the packed small-vector slab (zero cost).
    gamma = slab_ref[:, 0:f1]
    beta = slab_ref[:, f1:2 * f1]
    b2 = slab_ref[:, 2 * f1:2 * f1 + f2]
    b3 = slab_ref[:, 2 * f1 + f2:2 * f1 + f2 + a_pad]

    # fc1: bf16 MXU operands (cast at the dot), f32 accumulate. fc1 bias is
    # omitted: training-mode BN subtracts the batch mean, so it cancels.
    h1 = jnp.dot(x_ref[...].astype(jnp.bfloat16), w1_ref[...],
                 preferred_element_type=jnp.float32)

    # bn1 (training mode): centered two-pass stats, biased variance, eps=1e-5.
    mean = jnp.mean(h1, axis=0, keepdims=True)
    centered = h1 - mean
    var = jnp.mean(centered * centered, axis=0, keepdims=True)
    scale = jax.lax.rsqrt(var + BN_EPS) * gamma
    a1 = jnp.maximum(centered * scale + beta, 0.0)

    # fc2 + relu
    h2 = jnp.dot(a1.astype(jnp.bfloat16), w2_ref[...],
                 preferred_element_type=jnp.float32) + b2
    a2 = jnp.maximum(h2, 0.0)

    # fc3 + tanh, lane-dense (128-padded) output store
    h3 = jnp.dot(a2.astype(jnp.bfloat16), w3_ref[...],
                 preferred_element_type=jnp.float32) + b3
    out_ref[...] = jnp.tanh(h3)


# ---------------------------------------------------------------------------
# Batch-tiled two-pass path (large batches).
# ---------------------------------------------------------------------------
def actor_stats_kernel(x_ref, w1_ref, sum_ref, sumsq_ref):
    """Pass 1: fc1 on one batch tile, accumulate batch sum / sum-of-squares."""
    h1 = jnp.dot(x_ref[...].astype(jnp.bfloat16), w1_ref[...],
                 preferred_element_type=jnp.float32)

    @pl.when(pl.program_id(0) == 0)
    def _():
        sum_ref[...] = jnp.zeros_like(sum_ref)
        sumsq_ref[...] = jnp.zeros_like(sumsq_ref)

    sum_ref[...] += jnp.sum(h1, axis=0, keepdims=True)
    sumsq_ref[...] += jnp.sum(h1 * h1, axis=0, keepdims=True)


def actor_tile_kernel(x_ref, w1_ref, slab_ref, w2_ref, w3_ref,
                      sum_ref, sumsq_ref, out_ref, *, batch, f1, f2, a_pad):
    """Pass 2: re-do fc1 on the tile, normalize with global stats, fc2, fc3."""
    gamma = slab_ref[:, 0:f1]
    beta = slab_ref[:, f1:2 * f1]
    b2 = slab_ref[:, 2 * f1:2 * f1 + f2]
    b3 = slab_ref[:, 2 * f1 + f2:2 * f1 + f2 + a_pad]

    inv_b = jnp.float32(1.0 / batch)
    mean = sum_ref[...] * inv_b
    mean_sq = sumsq_ref[...] * inv_b
    var = jnp.maximum(mean_sq - mean * mean, 0.0)
    scale = jax.lax.rsqrt(var + BN_EPS) * gamma
    shift = beta - mean * scale

    h1 = jnp.dot(x_ref[...].astype(jnp.bfloat16), w1_ref[...],
                 preferred_element_type=jnp.float32)
    a1 = jnp.maximum(h1 * scale + shift, 0.0)

    h2 = jnp.dot(a1.astype(jnp.bfloat16), w2_ref[...],
                 preferred_element_type=jnp.float32) + b2
    a2 = jnp.maximum(h2, 0.0)

    h3 = jnp.dot(a2.astype(jnp.bfloat16), w3_ref[...],
                 preferred_element_type=jnp.float32) + b3
    out_ref[...] = jnp.tanh(h3)


# ---------------------------------------------------------------------------
# Wrapper
# ---------------------------------------------------------------------------
@functools.partial(jax.jit, static_argnames=("block_b",))
def actor_forward_padded(state, params, *, block_b=None):
    """Forward pass. Returns the 128-lane-padded output [B, A_pad]; slice
    [:, :action_size] at the final use site (keeps this latency-bound path to
    a single dispatched op).

    block_b: if given and B > block_b, use the batch-tiled two-pass path
    (requires B % block_b == 0). Otherwise use the fully fused single call.
    """
    B, S = state.shape
    F1 = params["w1t"].shape[1]
    F2 = params["w2t"].shape[1]
    A_pad = params["w3t"].shape[1]

    vmem = pl.BlockSpec(memory_space=pltpu.MemorySpace.VMEM)

    if block_b is None or B <= block_b:
        # ---- fully fused single call, whole operands in VMEM ----
        cost = pl.CostEstimate(
            flops=2 * B * (S * F1 + F1 * F2 + F2 * A_pad),
            transcendentals=B * A_pad + F1,              # tanh + rsqrt
            bytes_accessed=(B * S * 4 + S * F1 * 2
                            + (2 * F1 + F2 + A_pad) * 4
                            + F1 * F2 * 2 + F2 * A_pad * 2
                            + B * A_pad * 4),
        )
        return pl.pallas_call(
            functools.partial(actor_fused_kernel, f1=F1, f2=F2, a_pad=A_pad),
            out_shape=jax.ShapeDtypeStruct((B, A_pad), jnp.float32),
            in_specs=[vmem] * 5,
            out_specs=vmem,
            cost_estimate=cost,
        )(state, params["w1t"], params["slab"], params["w2t"], params["w3t"])

    if B % block_b != 0:
        raise ValueError(f"batch {B} must be a multiple of block_b={block_b}")
    n_tiles = B // block_b

    # ---- pass 1: fc1 + batch sum / sum-of-squares (accumulated over grid) ----
    bsum, bsumsq = pl.pallas_call(
        actor_stats_kernel,
        grid=(n_tiles,),
        out_shape=(jax.ShapeDtypeStruct((1, F1), jnp.float32),
                   jax.ShapeDtypeStruct((1, F1), jnp.float32)),
        in_specs=[pl.BlockSpec((block_b, S), lambda i: (i, 0)),
                  pl.BlockSpec((S, F1), lambda i: (0, 0))],
        out_specs=(pl.BlockSpec((1, F1), lambda i: (0, 0)),
                   pl.BlockSpec((1, F1), lambda i: (0, 0))),
        compiler_params=pltpu.CompilerParams(
            dimension_semantics=("arbitrary",)),
    )(state, params["w1t"])

    # ---- pass 2: normalize + fc2 + fc3 per batch tile (parallel on v7x) ----
    return pl.pallas_call(
        functools.partial(actor_tile_kernel, batch=B, f1=F1, f2=F2, a_pad=A_pad),
        grid=(n_tiles,),
        out_shape=jax.ShapeDtypeStruct((B, A_pad), jnp.float32),
        in_specs=[pl.BlockSpec((block_b, S), lambda i: (i, 0)),
                  pl.BlockSpec((S, F1), lambda i: (0, 0)),
                  pl.BlockSpec((1, 2 * F1 + F2 + A_pad), lambda i: (0, 0)),
                  pl.BlockSpec((F1, F2), lambda i: (0, 0)),
                  pl.BlockSpec((F2, A_pad), lambda i: (0, 0)),
                  pl.BlockSpec((1, F1), lambda i: (0, 0)),
                  pl.BlockSpec((1, F1), lambda i: (0, 0))],
        out_specs=pl.BlockSpec((block_b, A_pad), lambda i: (i, 0)),
        compiler_params=pltpu.CompilerParams(
            dimension_semantics=("parallel",)),
    )(state, params["w1t"], params["slab"], params["w2t"], params["w3t"],
      bsum, bsumsq)


# ---------------------------------------------------------------------------
# Parameter init (mirrors ActorNN.reset_parameters + default Linear biases)
# ---------------------------------------------------------------------------
def init_params(key, state_size, action_size, fc1_units=512, fc2_units=256):
    """Returns (params, ref): `params` are the kernel operands (bf16 matmul
    weights, padded fc3, no fc1 bias, packed f32 vector slab); `ref` holds f32
    unpadded copies (including fc1 bias) for the exact-semantics reference."""
    ks = jax.random.split(key, 6)

    # hidden_init uses layer.weight.size()[0] == out_features as "fan_in"
    lim1 = 1.0 / jnp.sqrt(jnp.float32(fc1_units))
    lim2 = 1.0 / jnp.sqrt(jnp.float32(fc2_units))
    w1 = jax.random.uniform(ks[0], (fc1_units, state_size), jnp.float32, -lim1, lim1)
    w2 = jax.random.uniform(ks[1], (fc2_units, fc1_units), jnp.float32, -lim2, lim2)
    w3 = jax.random.uniform(ks[2], (action_size, fc2_units), jnp.float32, -3e-3, 3e-3)

    # PyTorch Linear default bias init: U(-1/sqrt(in_features), +1/sqrt(in_features))
    bl1 = 1.0 / jnp.sqrt(jnp.float32(state_size))
    bl2 = 1.0 / jnp.sqrt(jnp.float32(fc1_units))
    bl3 = 1.0 / jnp.sqrt(jnp.float32(fc2_units))
    b1 = jax.random.uniform(ks[3], (1, fc1_units), jnp.float32, -bl1, bl1)
    b2 = jax.random.uniform(ks[4], (1, fc2_units), jnp.float32, -bl2, bl2)
    b3 = jax.random.uniform(ks[5], (1, action_size), jnp.float32, -bl3, bl3)

    gamma1 = jnp.ones((1, fc1_units), jnp.float32)
    beta1 = jnp.zeros((1, fc1_units), jnp.float32)

    # Pad fc3 to a full 128-lane output so the kernel's final store is unmasked.
    a_pad = pl.cdiv(action_size, LANE) * LANE
    w3t_pad = jnp.zeros((fc2_units, a_pad), jnp.float32).at[:, :action_size].set(w3.T)
    b3_pad = jnp.zeros((1, a_pad), jnp.float32).at[:, :action_size].set(b3)

    # Pack all small f32 vectors into one slab: [gamma | beta | b2 | b3_pad].
    slab = jnp.concatenate([gamma1, beta1, b2, b3_pad], axis=1)

    params = {
        "w1t": w1.T.astype(jnp.bfloat16),
        "w2t": w2.T.astype(jnp.bfloat16),
        "w3t": w3t_pad.astype(jnp.bfloat16),
        "slab": slab,
    }
    ref = {"w1": w1, "b1": b1, "gamma1": gamma1, "beta1": beta1,
           "w2": w2, "b2": b2, "w3": w3, "b3": b3}
    return params, ref


# ---------------------------------------------------------------------------
# References
# ---------------------------------------------------------------------------
def reference_forward_f32(state, ref):
    """Exact original-module semantics in f32 (includes fc1 bias)."""
    h1 = state @ ref["w1"].T + ref["b1"]
    mean = jnp.mean(h1, axis=0, keepdims=True)
    var = jnp.mean((h1 - mean) ** 2, axis=0, keepdims=True)
    h1n = (h1 - mean) / jnp.sqrt(var + BN_EPS) * ref["gamma1"] + ref["beta1"]
    a1 = jnp.maximum(h1n, 0.0)
    a2 = jnp.maximum(a1 @ ref["w2"].T + ref["b2"], 0.0)
    return jnp.tanh(a2 @ ref["w3"].T + ref["b3"])


def reference_forward_bf16(state, params, action_size, *, one_pass_stats=False):
    """Pure-JAX mirror of the kernel's precision strategy (tight check).
    one_pass_stats=True mirrors the batch-tiled path (sum/sumsq stats)."""
    f1 = params["w1t"].shape[1]
    f2 = params["w2t"].shape[1]
    slab = params["slab"]
    gamma = slab[:, 0:f1]
    beta = slab[:, f1:2 * f1]
    b2 = slab[:, 2 * f1:2 * f1 + f2]
    b3 = slab[:, 2 * f1 + f2:]

    h1 = jnp.dot(state.astype(jnp.bfloat16), params["w1t"],
                 preferred_element_type=jnp.float32)
    mean = jnp.mean(h1, axis=0, keepdims=True)
    if one_pass_stats:
        var = jnp.maximum(jnp.mean(h1 * h1, axis=0, keepdims=True) - mean * mean, 0.0)
        scale = jax.lax.rsqrt(var + BN_EPS) * gamma
        a1 = jnp.maximum(h1 * scale + (beta - mean * scale), 0.0)
    else:
        centered = h1 - mean
        var = jnp.mean(centered * centered, axis=0, keepdims=True)
        scale = jax.lax.rsqrt(var + BN_EPS) * gamma
        a1 = jnp.maximum(centered * scale + beta, 0.0)

    h2 = jnp.dot(a1.astype(jnp.bfloat16), params["w2t"],
                 preferred_element_type=jnp.float32) + b2
    a2 = jnp.maximum(h2, 0.0)
    h3 = jnp.dot(a2.astype(jnp.bfloat16), params["w3t"],
                 preferred_element_type=jnp.float32) + b3
    return jnp.tanh(h3)[:, :action_size]


if __name__ == "__main__":
    key = jax.random.PRNGKey(0)
    k_params, k_s1, k_s2 = jax.random.split(key, 3)

    state_size = 32
    action_size = 4
    params, ref = init_params(k_params, state_size, action_size)

    # ---- small-batch fused path (B=8) ----
    state8 = jax.random.normal(k_s1, (8, state_size), jnp.float32)
    out8_pad = jax.block_until_ready(actor_forward_padded(state8, params))
    out8 = out8_pad[:, :action_size]          # slice only at the final use site
    assert out8.shape == (8, action_size)

    tight8 = reference_forward_bf16(state8, params, action_size)
    assert jnp.allclose(out8, tight8, atol=2e-4, rtol=2e-4), \
        "fused: mismatch vs bf16 reference"
    loose8 = reference_forward_f32(state8, ref)
    assert jnp.allclose(out8, loose8, atol=5e-3, rtol=5e-2), \
        "fused: mismatch vs f32 module reference"

    # ---- batch-tiled two-pass path (B=256, TB=128 -> grid of 2) ----
    state256 = jax.random.normal(k_s2, (256, state_size), jnp.float32)
    out256_pad = jax.block_until_ready(
        actor_forward_padded(state256, params, block_b=128))
    out256 = out256_pad[:, :action_size]
    assert out256.shape == (256, action_size)

    tight256 = reference_forward_bf16(state256, params, action_size,
                                      one_pass_stats=True)
    assert jnp.allclose(out256, tight256, atol=1e-3, rtol=1e-3), \
        "tiled: mismatch vs bf16 reference"
    loose256 = reference_forward_f32(state256, ref)
    assert jnp.allclose(out256, loose256, atol=5e-3, rtol=5e-2), \
        "tiled: mismatch vs f32 module reference"

    print("KERNEL_OK")
</pallas_src>

<mosaic_0001>
module attributes {stable_mosaic.version = 11 : i64} {
  func.func @actor_fused_kernel(%arg0: memref<8x32xf32, #tpu.memory_space<vmem>>, %arg1: memref<32x512xbf16, #tpu.memory_space<vmem>>, %arg2: memref<1x1408xf32, #tpu.memory_space<vmem>>, %arg3: memref<512x256xbf16, #tpu.memory_space<vmem>>, %arg4: memref<256x128xbf16, #tpu.memory_space<vmem>>, %arg5: memref<8x128xf32, #tpu.memory_space<vmem>>) attributes {dimension_semantics = [], scalar_prefetch = 0 : i64, scratch_operands = 0 : i64, tpu.core_type = #tpu.core_type<tc>} {
    %c0 = arith.constant 0 : index
    %c0_0 = arith.constant 0 : index
    %0 = vector.load %arg2[%c0, %c0_0] : memref<1x1408xf32, #tpu.memory_space<vmem>>, vector<1x512xf32>
    %c0_1 = arith.constant 0 : index
    %c512 = arith.constant 512 : index
    %1 = vector.load %arg2[%c0_1, %c512] : memref<1x1408xf32, #tpu.memory_space<vmem>>, vector<1x512xf32>
    %c0_2 = arith.constant 0 : index
    %c1024 = arith.constant 1024 : index
    %2 = vector.load %arg2[%c0_2, %c1024] : memref<1x1408xf32, #tpu.memory_space<vmem>>, vector<1x256xf32>
    %c0_3 = arith.constant 0 : index
    %c1280 = arith.constant 1280 : index
    %3 = vector.load %arg2[%c0_3, %c1280] : memref<1x1408xf32, #tpu.memory_space<vmem>>, vector<1x128xf32>
    %c0_4 = arith.constant 0 : index
    %c0_5 = arith.constant 0 : index
    %4 = vector.load %arg0[%c0_4, %c0_5] : memref<8x32xf32, #tpu.memory_space<vmem>>, vector<8x32xf32>
    %5 = arith.truncf %4 : vector<8x32xf32> to vector<8x32xbf16>
    %c0_6 = arith.constant 0 : index
    %c0_7 = arith.constant 0 : index
    %6 = vector.load %arg1[%c0_6, %c0_7] : memref<32x512xbf16, #tpu.memory_space<vmem>>, vector<32x512xbf16>
    %cst = arith.constant dense<0.000000e+00> : vector<8x512xf32>
    %7 = tpu.matmul %5, %6, %cst {dimension_numbers = #tpu.dot_dimension_numbers<[1], [0], [0], [1], [0, 0, 1, 1], [], []>} : vector<8x32xbf16>, vector<32x512xbf16>, vector<8x512xf32> -> vector<8x512xf32>
    %cst_8 = arith.constant dense<0.000000e+00> : vector<512xf32>
    %8 = vector.multi_reduction <add>, %7, %cst_8 [0] : vector<8x512xf32> to vector<512xf32>
    %9 = vector.shape_cast %8 : vector<512xf32> to vector<1x512xf32>
    %cst_9 = arith.constant 8.000000e+00 : f32
    %10 = vector.broadcast %cst_9 : f32 to vector<1x512xf32>
    %11 = arith.divf %9, %10 : vector<1x512xf32>
    %12 = vector.broadcast %11 : vector<1x512xf32> to vector<8x512xf32>
    %13 = arith.subf %7, %12 : vector<8x512xf32>
    %14 = arith.mulf %13, %13 : vector<8x512xf32>
    %cst_10 = arith.constant dense<0.000000e+00> : vector<512xf32>
    %15 = vector.multi_reduction <add>, %14, %cst_10 [0] : vector<8x512xf32> to vector<512xf32>
    %16 = vector.shape_cast %15 : vector<512xf32> to vector<1x512xf32>
    %cst_11 = arith.constant 8.000000e+00 : f32
    %17 = vector.broadcast %cst_11 : f32 to vector<1x512xf32>
    %18 = arith.divf %16, %17 : vector<1x512xf32>
    %cst_12 = arith.constant 9.99999974E-6 : f32
    %19 = vector.broadcast %cst_12 : f32 to vector<1x512xf32>
    %20 = arith.addf %18, %19 : vector<1x512xf32>
    %21 = math.rsqrt %20 : vector<1x512xf32>
    %22 = arith.mulf %21, %0 : vector<1x512xf32>
    %23 = vector.broadcast %22 : vector<1x512xf32> to vector<8x512xf32>
    %24 = arith.mulf %13, %23 : vector<8x512xf32>
    %25 = vector.broadcast %1 : vector<1x512xf32> to vector<8x512xf32>
    %26 = arith.addf %24, %25 : vector<8x512xf32>
    %cst_13 = arith.constant 0.000000e+00 : f32
    %27 = vector.broadcast %cst_13 : f32 to vector<8x512xf32>
    %28 = arith.maximumf %26, %27 : vector<8x512xf32>
    %29 = arith.truncf %28 : vector<8x512xf32> to vector<8x512xbf16>
    %c0_14 = arith.constant 0 : index
    %c0_15 = arith.constant 0 : index
    %30 = vector.load %arg3[%c0_14, %c0_15] : memref<512x256xbf16, #tpu.memory_space<vmem>>, vector<512x256xbf16>
    %cst_16 = arith.constant dense<0.000000e+00> : vector<8x256xf32>
    %31 = tpu.matmul %29, %30, %cst_16 {dimension_numbers = #tpu.dot_dimension_numbers<[1], [0], [0], [1], [0, 0, 1, 1], [], []>} : vector<8x512xbf16>, vector<512x256xbf16>, vector<8x256xf32> -> vector<8x256xf32>
    %32 = vector.broadcast %2 : vector<1x256xf32> to vector<8x256xf32>
    %33 = arith.addf %31, %32 : vector<8x256xf32>
    %cst_17 = arith.constant 0.000000e+00 : f32
    %34 = vector.broadcast %cst_17 : f32 to vector<8x256xf32>
    %35 = arith.maximumf %33, %34 : vector<8x256xf32>
    %36 = arith.truncf %35 : vector<8x256xf32> to vector<8x256xbf16>
    %c0_18 = arith.constant 0 : index
    %c0_19 = arith.constant 0 : index
    %37 = vector.load %arg4[%c0_18, %c0_19] : memref<256x128xbf16, #tpu.memory_space<vmem>>, vector<256x128xbf16>
    %cst_20 = arith.constant dense<0.000000e+00> : vector<8x128xf32>
    %38 = tpu.matmul %36, %37, %cst_20 {dimension_numbers = #tpu.dot_dimension_numbers<[1], [0], [0], [1], [0, 0, 1, 1], [], []>} : vector<8x256xbf16>, vector<256x128xbf16>, vector<8x128xf32> -> vector<8x128xf32>
    %39 = vector.broadcast %3 : vector<1x128xf32> to vector<8x128xf32>
    %40 = arith.addf %38, %39 : vector<8x128xf32>
    %41 = math.tanh %40 : vector<8x128xf32>
    %c0_21 = arith.constant 0 : index
    %c0_22 = arith.constant 0 : index
    %42 = vector.load %arg5[%c0_21, %c0_22] : memref<8x128xf32, #tpu.memory_space<vmem>>, vector<8x128xf32>
    tpu.vector_store %arg5[%c0_21, %c0_22], %41 {strides = array<i32>} : memref<8x128xf32, #tpu.memory_space<vmem>>, vector<8x128xf32>,
    return
  }
}

</mosaic_0001>

<llo_original>
// kernel: actor_forward_padded.1
$region0: #{actor_forward_padded.1}
  #allocation0 [shape = 'u32[]', space=smem, size = 0x4, offset = 0x4, fixed_abs, tag = 'smem constant byte address 0x4 - core index']
  #allocation1 [shape = 'u32[144,128]{1,0:T(1,128)}', space=vmem, size = 0x12000, scoped, tag = 'internal scratch']
  %s0 = inlined_call_operand.hbm [shape: f32[8,32], index: 0, kind: input, shape index: {}]
  %s1 = inlined_call_operand.hbm [shape: bf16[32,512], index: 1, kind: input, shape index: {}]
  %s2 = inlined_call_operand.hbm [shape: f32[1,1408], index: 2, kind: input, shape index: {}]
  %s3 = inlined_call_operand.hbm [shape: bf16[512,256], index: 3, kind: input, shape index: {}]
  %s4 = inlined_call_operand.hbm [shape: bf16[256,128], index: 4, kind: input, shape index: {}]
  %s5 = inlined_call_operand.hbm [shape: f32[8,128], index: 5, kind: output, shape index: {}]
  %s6 = sld [smem:[#allocation0]]
  $region50: #{actor_forward_padded.1} parent=0
    _
  %s8 = ssub.s32 1, %s6
  %s9 = scalar_select 0, %s8, %s6
  $region1: #{actor_forward_padded.1} parent=0
    #allocation2 [shape = 'u8[4096]{0}', space=vmem, size = 0x1000, scoped, tag = 'input window, operand 0, single buffered']
    #allocation3 [shape = 's32[1]{0}', space=sflag, size = 0x4, scoped, tag = 'scoped memory for actor_forward_padded.1']
    #allocation4 [shape = 's32[1]{0}', space=sflag, size = 0x4, scoped, tag = 'scoped memory for actor_forward_padded.1']
    #allocation5 [shape = 'u8[32768]{0}', space=vmem, size = 0x8000, scoped, tag = 'input window, operand 1, single buffered']
    #allocation6 [shape = 's32[1]{0}', space=sflag, size = 0x4, scoped, tag = 'scoped memory for actor_forward_padded.1']
    #allocation7 [shape = 'u8[5632]{0}', space=vmem, size = 0x1800, scoped, tag = 'input window, operand 2, single buffered']
    #allocation8 [shape = 'u8[262144]{0}', space=vmem, size = 0x40000, scoped, tag = 'input window, operand 3, single buffered']
    #allocation9 [shape = 's32[1]{0}', space=sflag, size = 0x4, scoped, tag = 'scoped memory for actor_forward_padded.1']
    #allocation10 [shape = 'u8[65536]{0}', space=vmem, size = 0x10000, scoped, tag = 'input window, operand 4, single buffered']
    #allocation11 [shape = 'u8[4096]{0}', space=vmem, size = 0x1000, scoped, tag = 'output window, operand 0, single buffered']
    %10 = vsyncpa [#allocation3], 0
    %11 = vsyncpa [#allocation6], 0
    %12 = vsyncpa [#allocation9], 0
    %13 = vsyncpa [#allocation4], 0
    // Predicated region
    $region2: #{actor_forward_padded.1} parent=1 // pred_check
      _
    $region3: #{actor_forward_padded.1} parent=1 // pred_check_branch
      %15 = sbr.rel (0) target = $region5
    $region4: #{actor_forward_padded.1} parent=1 // pred_region
      %s17 = ssub.s32 128, 128
      %18 = vsyncadd [#allocation3], %s17
      %s20 = sshll.u32 [#allocation2], 4
      %s21 = int_to_ptr.vmem [resolvable:$true] %s20
      %23 = dma.hbm_to_vmem [thread:$0]  %s0, 128, %s21, [#allocation3]
    $region5: #{actor_forward_padded.1} parent=1 // pred_fallthru
      _
    // Predicated region
    $region6: #{actor_forward_padded.1} parent=1 // pred_check
      _
    $region7: #{actor_forward_padded.1} parent=1 // pred_check_branch
      %25 = sbr.rel (0) target = $region9
    $region8: #{actor_forward_padded.1} parent=1 // pred_region
      %s27 = ssub.s32 1024, 1024
      %28 = vsyncadd [#allocation6], %s27
      %s29 = sshll.u32 [#allocation5], 4
      %s30 = int_to_ptr.vmem [resolvable:$true] %s29
      %35 = dma.hbm_to_vmem [thread:$0]  %s1, 1024, %s30, [#allocation6], 256, 256, 16
    $region9: #{actor_forward_padded.1} parent=1 // pred_fallthru
      _
    // Predicated region
    $region10: #{actor_forward_padded.1} parent=1 // pred_check
      _
    $region11: #{actor_forward_padded.1} parent=1 // pred_check_branch
      %37 = sbr.rel (0) target = $region13
    $region12: #{actor_forward_padded.1} parent=1 // pred_region
      %s39 = ssub.s32 176, 176
      %40 = vsyncadd [#allocation6], %s39
      %s42 = sshll.u32 [#allocation7], 4
      %s43 = int_to_ptr.vmem [resolvable:$true] %s42
      %45 = dma.hbm_to_vmem [thread:$0]  %s2, 176, %s43, [#allocation6]
    $region13: #{actor_forward_padded.1} parent=1 // pred_fallthru
      _
    // Predicated region
    $region14: #{actor_forward_padded.1} parent=1 // pred_check
      _
    $region15: #{actor_forward_padded.1} parent=1 // pred_check_branch
      %47 = sbr.rel (0) target = $region17
    $region16: #{actor_forward_padded.1} parent=1 // pred_region
      %s49 = ssub.s32 8192, 8192
      %50 = vsyncadd [#allocation9], %s49
      %s51 = sshll.u32 [#allocation8], 4
      %s52 = int_to_ptr.vmem [resolvable:$true] %s51
      %57 = dma.hbm_to_vmem [thread:$0]  %s3, 8192, %s52, [#allocation9], 128, 128, 8
    $region17: #{actor_forward_padded.1} parent=1 // pred_fallthru
      _
    // Predicated region
    $region18: #{actor_forward_padded.1} parent=1 // pred_check
      _
    $region19: #{actor_forward_padded.1} parent=1 // pred_check_branch
      %59 = sbr.rel (0) target = $region21
    $region20: #{actor_forward_padded.1} parent=1 // pred_region
      %s61 = ssub.s32 2048, 2048
      %62 = vsyncadd [#allocation9], %s61
      %s63 = sshll.u32 [#allocation10], 4
      %s64 = int_to_ptr.vmem [resolvable:$true] %s63
      %69 = dma.hbm_to_vmem [thread:$0]  %s4, 2048, %s64, [#allocation9], 64, 64, 4
    $region21: #{actor_forward_padded.1} parent=1 // pred_fallthru
      _
    // Predicated region
    $region22: #{actor_forward_padded.1} parent=1 // pred_check
      _
    $region23: #{actor_forward_padded.1} parent=1 // pred_check_branch
      %71 = sbr.rel (0) target = $region25
    $region24: #{actor_forward_padded.1} parent=1 // pred_region
      %72 = dma.done [#allocation3], 128
    $region25: #{actor_forward_padded.1} parent=1 // pred_fallthru
      _
    // Predicated region
    $region26: #{actor_forward_padded.1} parent=1 // pred_check
      _
    $region27: #{actor_forward_padded.1} parent=1 // pred_check_branch
      %74 = sbr.rel (0) target = $region29
    $region28: #{actor_forward_padded.1} parent=1 // pred_region
      %75 = dma.done [#allocation6], 1024
    $region29: #{actor_forward_padded.1} parent=1 // pred_fallthru
      _
    // Predicated region
    $region30: #{actor_forward_padded.1} parent=1 // pred_check
      _
    $region31: #{actor_forward_padded.1} parent=1 // pred_check_branch
      %77 = sbr.rel (0) target = $region33
    $region32: #{actor_forward_padded.1} parent=1 // pred_region
      %78 = dma.done [#allocation6], 176
    $region33: #{actor_forward_padded.1} parent=1 // pred_fallthru
      _
    // Predicated region
    $region34: #{actor_forward_padded.1} parent=1 // pred_check
      _
    $region35: #{actor_forward_padded.1} parent=1 // pred_check_branch
      %80 = sbr.rel (0) target = $region37
    $region36: #{actor_forward_padded.1} parent=1 // pred_region
      %81 = dma.done [#allocation9], 8192
    $region37: #{actor_forward_padded.1} parent=1 // pred_fallthru
      _
    // Predicated region
    $region38: #{actor_forward_padded.1} parent=1 // pred_check
      _
    $region39: #{actor_forward_padded.1} parent=1 // pred_check_branch
      %83 = sbr.rel (0) target = $region41
    $region40: #{actor_forward_padded.1} parent=1 // pred_region
      %84 = dma.done [#allocation9], 2048
    $region41: #{actor_forward_padded.1} parent=1 // pred_fallthru
      _
    %v86 = vld [vmem:[#allocation7] sm:$0xf]
    %v87 = vld [vmem:[#allocation7 + $0x4] sm:$0xf]
    %v88 = vld [vmem:[#allocation7 + $0x8] sm:$0x3]
    %v89 = vld [vmem:[#allocation7 + $0xa] sm:$0x1]
    %v90 = vld [vmem:[#allocation2] sm:$0xff]
    %v91 = vpack.c.bf16 %v90, %v90
    %v92 = vld [vmem:[#allocation5] sm:$0xff]
    %v93 = vld [vmem:[#allocation5 + $0x8] sm:$0xff]
    %v94 = vld [vmem:[#allocation5 + $0x10] sm:$0xff]
    %v95 = vld [vmem:[#allocation5 + $0x18] sm:$0xff]
    %v96 = vld [vmem:[#allocation5 + $0x20] sm:$0xff]
    %v97 = vld [vmem:[#allocation5 + $0x28] sm:$0xff]
    %v98 = vld [vmem:[#allocation5 + $0x30] sm:$0xff]
    %v99 = vld [vmem:[#allocation5 + $0x38] sm:$0xff]
    %v108 = vunpack.c.l.b16 %v92
    %v109 = vunpack.c.h.b16 %v92
    %v110 = vunpack.c.l.b16 %v93
    %v111 = vunpack.c.h.b16 %v93
    %v112 = vunpack.c.l.b16 %v94
    %v113 = vunpack.c.h.b16 %v94
    %v114 = vunpack.c.l.b16 %v95
    %v115 = vunpack.c.h.b16 %v95
    %v116 = vunpack.c.l.b16 %v96
    %v117 = vunpack.c.h.b16 %v96
    %v118 = vunpack.c.l.b16 %v97
    %v119 = vunpack.c.h.b16 %v97
    %v120 = vunpack.c.l.b16 %v98
    %v121 = vunpack.c.h.b16 %v98
    %v122 = vunpack.c.l.b16 %v99
    %v123 = vunpack.c.h.b16 %v99
    %v124 = vpack.c.b16 %v112, %v108
    %v125 = vpack.c.b16 %v113, %v109
    %v126 = vpack.c.b16 %v114, %v110
    %v127 = vpack.c.b16 %v115, %v111
    %v128 = vpack.c.b16 %v120, %v116
    %v129 = vpack.c.b16 %v121, %v117
    %v130 = vpack.c.b16 %v122, %v118
    %v131 = vpack.c.b16 %v123, %v119
    %vm140 = vcmask 261120
    %v142 = vsel %vm140, %v91, 0
    %144 = vmatprep.subr.bf16.mxu0 %v125
    %145 = vmatpush1.bf16.msra.mxu0 %v124
    %146 = vmatprep.subr.bf16.mxu0 %v129
    %147 = vmatpush1.bf16.msra.mxu0 %v128
    %148 = vmatprep.subr.bf16.mxu0 0
    %149 = vmatpush1.bf16.msra.mxu0 0
    %150 = vmatprep.subr.bf16.mxu0 0
    %151 = vmatpush1.bf16.msra.mxu0 0
    %152 = vmatprep.subr.bf16.mxu0 0
    %153 = vmatpush1.bf16.msra.mxu0 0
    %154 = vmatprep.subr.bf16.mxu0 0
    %155 = vmatpush1.bf16.msra.mxu0 0
    %156 = vmatprep.subr.bf16.mxu0 0
    %157 = vmatpush1.bf16.msra.mxu0 0
    %158 = vmatprep.subr.bf16.mxu0 0
    %159 = vmatpush1.bf16.msra.mxu0 0
    %160 = vmatprep.subr.bf16.mxu0 0
    %161 = vmatpush1.bf16.msra.mxu0 0
    %162 = vmatprep.subr.bf16.mxu0 0
    %163 = vmatpush1.bf16.msra.mxu0 0
    %164 = vmatprep.subr.bf16.mxu0 0
    %165 = vmatpush1.bf16.msra.mxu0 0
    %166 = vmatprep.subr.bf16.mxu0 0
    %167 = vmatpush1.bf16.msra.mxu0 0
    %168 = vmatprep.subr.bf16.mxu0 0
    %169 = vmatpush1.bf16.msra.mxu0 0
    %170 = vmatprep.subr.bf16.mxu0 0
    %171 = vmatpush1.bf16.msra.mxu0 0
    %172 = vmatprep.subr.bf16.mxu0 0
    %173 = vmatpush1.bf16.msra.mxu0 0
    %174 = vmatprep.subr.bf16.mxu0 0
    %175 = vmatpush1.bf16.msra.mxu0 0
    %176 = vmatprep.mubr.bf16.mxu0 0
    %177 = vmatmul.mubr.bf16.gmra.mrb[0].mxu0 %v142
    %v178 = vpop.f32.mrb[0].mxu0
    %v179 = vadd.f32 0.0, %v178
    %v180 = vpop.f32.mrb[0].mxu0
    %v181 = vadd.f32 0.0, %v180
    %v182 = vpop.f32.mrb[0].mxu0
    %v183 = vpop.f32.mrb[0].mxu0
    %184 = vdwg.mxu0
    %185 = vmatprep.subr.bf16.mxu0 %v127
    %186 = vmatpush1.bf16.msra.mxu0 %v126
    %187 = vmatprep.subr.bf16.mxu0 %v131
    %188 = vmatpush1.bf16.msra.mxu0 %v130
    %189 = vmatprep.subr.bf16.mxu0 0
    %190 = vmatpush1.bf16.msra.mxu0 0
    %191 = vmatprep.subr.bf16.mxu0 0
    %192 = vmatpush1.bf16.msra.mxu0 0
    %193 = vmatprep.subr.bf16.mxu0 0
    %194 = vmatpush1.bf16.msra.mxu0 0
    %195 = vmatprep.subr.bf16.mxu0 0
    %196 = vmatpush1.bf16.msra.mxu0 0
    %197 = vmatprep.subr.bf16.mxu0 0
    %198 = vmatpush1.bf16.msra.mxu0 0
    %199 = vmatprep.subr.bf16.mxu0 0
    %200 = vmatpush1.bf16.msra.mxu0 0
    %201 = vmatprep.subr.bf16.mxu0 0
    %202 = vmatpush1.bf16.msra.mxu0 0
    %203 = vmatprep.subr.bf16.mxu0 0
    %204 = vmatpush1.bf16.msra.mxu0 0
    %205 = vmatprep.subr.bf16.mxu0 0
    %206 = vmatpush1.bf16.msra.mxu0 0
    %207 = vmatprep.subr.bf16.mxu0 0
    %208 = vmatpush1.bf16.msra.mxu0 0
    %209 = vmatprep.subr.bf16.mxu0 0
    %210 = vmatpush1.bf16.msra.mxu0 0
    %211 = vmatprep.subr.bf16.mxu0 0
    %212 = vmatpush1.bf16.msra.mxu0 0
    %213 = vmatprep.subr.bf16.mxu0 0
    %214 = vmatpush1.bf16.msra.mxu0 0
    %215 = vmatprep.subr.bf16.mxu0 0
    %216 = vmatpush1.bf16.msra.mxu0 0
    %217 = vmatprep.mubr.bf16.mxu0 0
    %218 = vmatmul.mubr.bf16.gmra.mrb[0].mxu0 %v142
    %v219 = vpop.f32.mrb[0].mxu0
    %v220 = vadd.f32 0.0, %v219
    %v221 = vpop.f32.mrb[0].mxu0
    %v222 = vadd.f32 0.0, %v221
    %v223 = vpop.f32.mrb[0].mxu0
    %v224 = vpop.f32.mrb[0].mxu0
    %225 = vdwg.mxu0
    %v226 = vrot.slane %v179, 4
    %v227 = vadd.f32 %v179, %v226
    %v228 = vrot.slane %v227, 2
    %v229 = vadd.f32 %v227, %v228
    %v230 = vrot.slane %v229, 1
    %v231 = vadd.f32 %v229, %v230
    %v232 = vrot.slane %v181, 4
    %v233 = vadd.f32 %v181, %v232
    %v234 = vrot.slane %v233, 2
    %v235 = vadd.f32 %v233, %v234
    %v236 = vrot.slane %v235, 1
    %v237 = vadd.f32 %v235, %v236
    %v238 = vrot.slane %v220, 4
    %v239 = vadd.f32 %v220, %v238
    %v240 = vrot.slane %v239, 2
    %v241 = vadd.f32 %v239, %v240
    %v242 = vrot.slane %v241, 1
    %v243 = vadd.f32 %v241, %v242
    %v244 = vrot.slane %v222, 4
    %v245 = vadd.f32 %v222, %v244
    %v246 = vrot.slane %v245, 2
    %v247 = vadd.f32 %v245, %v246
    %v248 = vrot.slane %v247, 1
    %v249 = vadd.f32 %v247, %v248
    %v250 = vrcp.pop 8.0
    %v251 = vmul.f32 %v231, %v250
    %v252 = vmul.f32 %v237, %v250
    %v253 = vmul.f32 %v243, %v250
    %v254 = vmul.f32 %v249, %v250
    %v255 = vsub.f32 %v179, %v251
    %v256 = vsub.f32 %v181, %v252
    %v257 = vsub.f32 %v220, %v253
    %v258 = vsub.f32 %v222, %v254
    %v259 = vmul.f32 %v255, %v255
    %v260 = vmul.f32 %v256, %v256
    %v261 = vmul.f32 %v257, %v257
    %v262 = vmul.f32 %v258, %v258
    %v263 = vrot.slane %v259, 4
    %v264 = vadd.f32 %v259, %v263
    %v265 = vrot.slane %v264, 2
    %v266 = vadd.f32 %v264, %v265
    %v267 = vrot.slane %v266, 1
    %v268 = vadd.f32 %v266, %v267
    %v269 = vrot.slane %v260, 4
    %v270 = vadd.f32 %v260, %v269
    %v271 = vrot.slane %v270, 2
    %v272 = vadd.f32 %v270, %v271
    %v273 = vrot.slane %v272, 1
    %v274 = vadd.f32 %v272, %v273
    %v275 = vrot.slane %v261, 4
    %v276 = vadd.f32 %v261, %v275
    %v277 = vrot.slane %v276, 2
    %v278 = vadd.f32 %v276, %v277
    %v279 = vrot.slane %v278, 1
    %v280 = vadd.f32 %v278, %v279
    %v281 = vrot.slane %v262, 4
    %v282 = vadd.f32 %v262, %v281
    %v283 = vrot.slane %v282, 2
    %v284 = vadd.f32 %v282, %v283
    %v285 = vrot.slane %v284, 1
    %v286 = vadd.f32 %v284, %v285
    %v287 = vmul.f32 %v268, %v250
    %v288 = vmul.f32 %v274, %v250
    %v289 = vmul.f32 %v280, %v250
    %v290 = vmul.f32 %v286, %v250
    %v291 = vadd.f32 %v287, 1e-05
    %v292 = vadd.f32 %v288, 1e-05
    %v293 = vadd.f32 %v289, 1e-05
    %v294 = vadd.f32 %v290, 1e-05
    %v295 = vrsqrt.pop %v291
    %v296 = vrsqrt.pop %v292
    %v297 = vrsqrt.pop %v293
    %v298 = vrsqrt.pop %v294
    %v300 = vlaneseq
    %v301 = vshrl.u32 %v300, 7
    %v302 = vsub.s32 0, %v301
    %v303 = vrot.slane %v86, %v302
    %v304 = vlaneseq
    %v305 = vshrl.u32 %v304, 7
    %v306 = vsub.s32 1, %v305
    %v307 = vrot.slane %v86, %v306
    %v308 = vlaneseq
    %v309 = vshrl.u32 %v308, 7
    %v310 = vsub.s32 2, %v309
    %v311 = vrot.slane %v86, %v310
    %v312 = vlaneseq
    %v313 = vshrl.u32 %v312, 7
    %v314 = vsub.s32 3, %v313
    %v315 = vrot.slane %v86, %v314
    %v320 = vmul.f32 %v295, %v303
    %v321 = vmul.f32 %v296, %v307
    %v322 = vmul.f32 %v297, %v311
    %v323 = vmul.f32 %v298, %v315
    %v324 = vlaneseq
    %v325 = vshrl.u32 %v324, 7
    %v326 = vsub.s32 0, %v325
    %v327 = vrot.slane %v320, %v326
    %v328 = vlaneseq
    %v329 = vshrl.u32 %v328, 7
    %v330 = vsub.s32 0, %v329
    %v331 = vrot.slane %v321, %v330
    %v332 = vlaneseq
    %v333 = vshrl.u32 %v332, 7
    %v334 = vsub.s32 0, %v333
    %v335 = vrot.slane %v322, %v334
    %v336 = vlaneseq
    %v337 = vshrl.u32 %v336, 7
    %v338 = vsub.s32 0, %v337
    %v339 = vrot.slane %v323, %v338
    %v340 = vmul.f32 %v255, %v327
    %v341 = vmul.f32 %v256, %v331
    %v342 = vmul.f32 %v257, %v335
    %v343 = vmul.f32 %v258, %v339
    %v345 = vlaneseq
    %v346 = vshrl.u32 %v345, 7
    %v347 = vsub.s32 0, %v346
    %v348 = vrot.slane %v87, %v347
    %v349 = vlaneseq
    %v350 = vshrl.u32 %v349, 7
    %v351 = vsub.s32 1, %v350
    %v352 = vrot.slane %v87, %v351
    %v353 = vlaneseq
    %v354 = vshrl.u32 %v353, 7
    %v355 = vsub.s32 2, %v354
    %v356 = vrot.slane %v87, %v355
    %v357 = vlaneseq
    %v358 = vshrl.u32 %v357, 7
    %v359 = vsub.s32 3, %v358
    %v360 = vrot.slane %v87, %v359
    %v365 = vadd.f32 %v340, %v348
    %v366 = vadd.f32 %v341, %v352
    %v367 = vadd.f32 %v342, %v356
    %v368 = vadd.f32 %v343, %v360
    %v369 = vmax.f32 %v365, 0.0
    %v370 = vmax.f32 %v366, 0.0
    %v371 = vmax.f32 %v367, 0.0
    %v372 = vmax.f32 %v368, 0.0
    %v373 = vpack.c.bf16 %v369, %v369
    %v374 = vpack.c.bf16 %v370, %v370
    %v375 = vpack.c.bf16 %v371, %v371
    %v376 = vpack.c.bf16 %v372, %v372
    %v377 = vld [vmem:[#allocation8] sm:$0xff]
    %v378 = vld [vmem:[#allocation8 + $0x8] sm:$0xff]
    %v379 = vld [vmem:[#allocation8 + $0x10] sm:$0xff]
    %v380 = vld [vmem:[#allocation8 + $0x18] sm:$0xff]
    %v381 = vld [vmem:[#allocation8 + $0x20] sm:$0xff]
    %v382 = vld [vmem:[#allocation8 + $0x28] sm:$0xff]
    %v383 = vld [vmem:[#allocation8 + $0x30] sm:$0xff]
    %v384 = vld [vmem:[#allocation8 + $0x38] sm:$0xff]
    %v385 = vld [vmem:[#allocation8 + $0x40] sm:$0xff]
    %v386 = vld [vmem:[#allocation8 + $0x48] sm:$0xff]
    %v387 = vld [vmem:[#allocation8 + $0x50] sm:$0xff]
    %v388 = vld [vmem:[#allocation8 + $0x58] sm:$0xff]
    %v389 = vld [vmem:[#allocation8 + $0x60] sm:$0xff]
    %v390 = vld [vmem:[#allocation8 + $0x68] sm:$0xff]
    %v391 = vld [vmem:[#allocation8 + $0x70] sm:$0xff]
    %v392 = vld [vmem:[#allocation8 + $0x78] sm:$0xff]
    %v393 = vld [vmem:[#allocation8 + $0x80] sm:$0xff]
    %v394 = vld [vmem:[#allocation8 + $0x88] sm:$0xff]
    %v395 = vld [vmem:[#allocation8 + $0x90] sm:$0xff]
    %v396 = vld [vmem:[#allocation8 + $0x98] sm:$0xff]
    %v397 = vld [vmem:[#allocation8 + $0xa0] sm:$0xff]
    %v398 = vld [vmem:[#allocation8 + $0xa8] sm:$0xff]
    %v399 = vld [vmem:[#allocation8 + $0xb0] sm:$0xff]
    %v400 = vld [vmem:[#allocation8 + $0xb8] sm:$0xff]
    %v401 = vld [vmem:[#allocation8 + $0xc0] sm:$0xff]
    %v402 = vld [vmem:[#allocation8 + $0xc8] sm:$0xff]
    %v403 = vld [vmem:[#allocation8 + $0xd0] sm:$0xff]
    %v404 = vld [vmem:[#allocation8 + $0xd8] sm:$0xff]
    %v405 = vld [vmem:[#allocation8 + $0xe0] sm:$0xff]
    %v406 = vld [vmem:[#allocation8 + $0xe8] sm:$0xff]
    %v407 = vld [vmem:[#allocation8 + $0xf0] sm:$0xff]
    %v408 = vld [vmem:[#allocation8 + $0xf8] sm:$0xff]
    %v409 = vld [vmem:[#allocation8 + $0x100] sm:$0xff]
    %v410 = vld [vmem:[#allocation8 + $0x108] sm:$0xff]
    %v411 = vld [vmem:[#allocation8 + $0x110] sm:$0xff]
    %v412 = vld [vmem:[#allocation8 + $0x118] sm:$0xff]
    %v413 = vld [vmem:[#allocation8 + $0x120] sm:$0xff]
    %v414 = vld [vmem:[#allocation8 + $0x128] sm:$0xff]
    %v415 = vld [vmem:[#allocation8 + $0x130] sm:$0xff]
    %v416 = vld [vmem:[#allocation8 + $0x138] sm:$0xff]
    %v417 = vld [vmem:[#allocation8 + $0x140] sm:$0xff]
    %v418 = vld [vmem:[#allocation8 + $0x148] sm:$0xff]
    %v419 = vld [vmem:[#allocation8 + $0x150] sm:$0xff]
    %v420 = vld [vmem:[#allocation8 + $0x158] sm:$0xff]
    %v421 = vld [vmem:[#allocation8 + $0x160] sm:$0xff]
    %v422 = vld [vmem:[#allocation8 + $0x168] sm:$0xff]
    %v423 = vld [vmem:[#allocation8 + $0x170] sm:$0xff]
    %v424 = vld [vmem:[#allocation8 + $0x178] sm:$0xff]
    %v425 = vld [vmem:[#allocation8 + $0x180] sm:$0xff]
    %v426 = vld [vmem:[#allocation8 + $0x188] sm:$0xff]
    %v427 = vld [vmem:[#allocation8 + $0x190] sm:$0xff]
    %v428 = vld [vmem:[#allocation8 + $0x198] sm:$0xff]
    %v429 = vld [vmem:[#allocation8 + $0x1a0] sm:$0xff]
    %v430 = vld [vmem:[#allocation8 + $0x1a8] sm:$0xff]
    %v431 = vld [vmem:[#allocation8 + $0x1b0] sm:$0xff]
    %v432 = vld [vmem:[#allocation8 + $0x1b8] sm:$0xff]
    %v433 = vld [vmem:[#allocation8 + $0x1c0] sm:$0xff]
    %v434 = vld [vmem:[#allocation8 + $0x1c8] sm:$0xff]
    %v435 = vld [vmem:[#allocation8 + $0x1d0] sm:$0xff]
    %v436 = vld [vmem:[#allocation8 + $0x1d8] sm:$0xff]
    %v437 = vld [vmem:[#allocation8 + $0x1e0] sm:$0xff]
    %v438 = vld [vmem:[#allocation8 + $0x1e8] sm:$0xff]
    %v439 = vld [vmem:[#allocation8 + $0x1f0] sm:$0xff]
    %v440 = vld [vmem:[#allocation8 + $0x1f8] sm:$0xff]
    %v442 = vlaneseq
    %v443 = vshrl.u32 %v442, 7
    %v444 = vsub.s32 0, %v443
    %v445 = vrot.slane %v88, %v444
    %v446 = vlaneseq
    %v447 = vshrl.u32 %v446, 7
    %v448 = vsub.s32 1, %v447
    %v449 = vrot.slane %v88, %v448
    %v516 = vunpack.c.l.b16 %v377
    %v517 = vunpack.c.h.b16 %v377
    %v518 = vunpack.c.l.b16 %v378
    %v519 = vunpack.c.h.b16 %v378
    %v520 = vunpack.c.l.b16 %v379
    %v521 = vunpack.c.h.b16 %v379
    %v522 = vunpack.c.l.b16 %v380
    %v523 = vunpack.c.h.b16 %v380
    %v524 = vunpack.c.l.b16 %v381
    %v525 = vunpack.c.h.b16 %v381
    %v526 = vunpack.c.l.b16 %v382
    %v527 = vunpack.c.h.b16 %v382
    %v528 = vunpack.c.l.b16 %v383
    %v529 = vunpack.c.h.b16 %v383
    %v530 = vunpack.c.l.b16 %v384
    %v531 = vunpack.c.h.b16 %v384
    %v532 = vunpack.c.l.b16 %v385
    %v533 = vunpack.c.h.b16 %v385
    %v534 = vunpack.c.l.b16 %v386
    %v535 = vunpack.c.h.b16 %v386
    %v536 = vunpack.c.l.b16 %v387
    %v537 = vunpack.c.h.b16 %v387
    %v538 = vunpack.c.l.b16 %v388
    %v539 = vunpack.c.h.b16 %v388
    %v540 = vunpack.c.l.b16 %v389
    %v541 = vunpack.c.h.b16 %v389
    %v542 = vunpack.c.l.b16 %v390
    %v543 = vunpack.c.h.b16 %v390
    %v544 = vunpack.c.l.b16 %v391
    %v545 = vunpack.c.h.b16 %v391
    %v546 = vunpack.c.l.b16 %v392
    %v547 = vunpack.c.h.b16 %v392
    %v548 = vunpack.c.l.b16 %v393
    %v549 = vunpack.c.h.b16 %v393
    %v550 = vunpack.c.l.b16 %v394
    %v551 = vunpack.c.h.b16 %v394
    %v552 = vunpack.c.l.b16 %v395
    %v553 = vunpack.c.h.b16 %v395
    %v554 = vunpack.c.l.b16 %v396
    %v555 = vunpack.c.h.b16 %v396
    %v556 = vunpack.c.l.b16 %v397
    %v557 = vunpack.c.h.b16 %v397
    %v558 = vunpack.c.l.b16 %v398
    %v559 = vunpack.c.h.b16 %v398
    %v560 = vunpack.c.l.b16 %v399
    %v561 = vunpack.c.h.b16 %v399
    %v562 = vunpack.c.l.b16 %v400
    %v563 = vunpack.c.h.b16 %v400
    %v564 = vunpack.c.l.b16 %v401
    %v565 = vunpack.c.h.b16 %v401
    %v566 = vunpack.c.l.b16 %v402
    %v567 = vunpack.c.h.b16 %v402
    %v568 = vunpack.c.l.b16 %v403
    %v569 = vunpack.c.h.b16 %v403
    %v570 = vunpack.c.l.b16 %v404
    %v571 = vunpack.c.h.b16 %v404
    %v572 = vunpack.c.l.b16 %v405
    %v573 = vunpack.c.h.b16 %v405
    %v574 = vunpack.c.l.b16 %v406
    %v575 = vunpack.c.h.b16 %v406
    %v576 = vunpack.c.l.b16 %v407
    %v577 = vunpack.c.h.b16 %v407
    %v578 = vunpack.c.l.b16 %v408
    %v579 = vunpack.c.h.b16 %v408
    %v580 = vunpack.c.l.b16 %v409
    %v581 = vunpack.c.h.b16 %v409
    %v582 = vunpack.c.l.b16 %v410
    %v583 = vunpack.c.h.b16 %v410
    %v584 = vunpack.c.l.b16 %v411
    %v585 = vunpack.c.h.b16 %v411
    %v586 = vunpack.c.l.b16 %v412
    %v587 = vunpack.c.h.b16 %v412
    %v588 = vunpack.c.l.b16 %v413
    %v589 = vunpack.c.h.b16 %v413
    %v590 = vunpack.c.l.b16 %v414
    %v591 = vunpack.c.h.b16 %v414
    %v592 = vunpack.c.l.b16 %v415
    %v593 = vunpack.c.h.b16 %v415
    %v594 = vunpack.c.l.b16 %v416
    %v595 = vunpack.c.h.b16 %v416
    %v596 = vunpack.c.l.b16 %v417
    %v597 = vunpack.c.h.b16 %v417
    %v598 = vunpack.c.l.b16 %v418
    %v599 = vunpack.c.h.b16 %v418
    %v600 = vunpack.c.l.b16 %v419
    %v601 = vunpack.c.h.b16 %v419
    %v602 = vunpack.c.l.b16 %v420
    %v603 = vunpack.c.h.b16 %v420
    %v604 = vunpack.c.l.b16 %v421
    %v605 = vunpack.c.h.b16 %v421
    %v606 = vunpack.c.l.b16 %v422
    %v607 = vunpack.c.h.b16 %v422
    %v608 = vunpack.c.l.b16 %v423
    %v609 = vunpack.c.h.b16 %v423
    %v610 = vunpack.c.l.b16 %v424
    %v611 = vunpack.c.h.b16 %v424
    %v612 = vunpack.c.l.b16 %v425
    %v613 = vunpack.c.h.b16 %v425
    %v614 = vunpack.c.l.b16 %v426
    %v615 = vunpack.c.h.b16 %v426
    %v616 = vunpack.c.l.b16 %v427
    %v617 = vunpack.c.h.b16 %v427
    %v618 = vunpack.c.l.b16 %v428
    %v619 = vunpack.c.h.b16 %v428
    %v620 = vunpack.c.l.b16 %v429
    %v621 = vunpack.c.h.b16 %v429
    %v622 = vunpack.c.l.b16 %v430
    %v623 = vunpack.c.h.b16 %v430
    %v624 = vunpack.c.l.b16 %v431
    %v625 = vunpack.c.h.b16 %v431
    %v626 = vunpack.c.l.b16 %v432
    %v627 = vunpack.c.h.b16 %v432
    %v628 = vunpack.c.l.b16 %v433
    %v629 = vunpack.c.h.b16 %v433
    %v630 = vunpack.c.l.b16 %v434
    %v631 = vunpack.c.h.b16 %v434
    %v632 = vunpack.c.l.b16 %v435
    %v633 = vunpack.c.h.b16 %v435
    %v634 = vunpack.c.l.b16 %v436
    %v635 = vunpack.c.h.b16 %v436
    %v636 = vunpack.c.l.b16 %v437
    %v637 = vunpack.c.h.b16 %v437
    %v638 = vunpack.c.l.b16 %v438
    %v639 = vunpack.c.h.b16 %v438
    %v640 = vunpack.c.l.b16 %v439
    %v641 = vunpack.c.h.b16 %v439
    %v642 = vunpack.c.l.b16 %v440
    %v643 = vunpack.c.h.b16 %v440
    %v644 = vpack.c.b16 %v518, %v516
    %v645 = vpack.c.b16 %v519, %v517
    %v646 = vpack.c.b16 %v522, %v520
    %v647 = vpack.c.b16 %v523, %v521
    %v648 = vpack.c.b16 %v526, %v524
    %v649 = vpack.c.b16 %v527, %v525
    %v650 = vpack.c.b16 %v530, %v528
    %v651 = vpack.c.b16 %v531, %v529
    %v652 = vpack.c.b16 %v534, %v532
    %v653 = vpack.c.b16 %v535, %v533
    %v654 = vpack.c.b16 %v538, %v536
    %v655 = vpack.c.b16 %v539, %v537
    %v656 = vpack.c.b16 %v542, %v540
    %v657 = vpack.c.b16 %v543, %v541
    %v658 = vpack.c.b16 %v546, %v544
    %v659 = vpack.c.b16 %v547, %v545
    %v660 = vpack.c.b16 %v550, %v548
    %v661 = vpack.c.b16 %v551, %v549
    %v662 = vpack.c.b16 %v554, %v552
    %v663 = vpack.c.b16 %v555, %v553
    %v664 = vpack.c.b16 %v558, %v556
    %v665 = vpack.c.b16 %v559, %v557
    %v666 = vpack.c.b16 %v562, %v560
    %v667 = vpack.c.b16 %v563, %v561
    %v668 = vpack.c.b16 %v566, %v564
    %v669 = vpack.c.b16 %v567, %v565
    %v670 = vpack.c.b16 %v570, %v568
    %v671 = vpack.c.b16 %v571, %v569
    %v672 = vpack.c.b16 %v574, %v572
    %v673 = vpack.c.b16 %v575, %v573
    %v674 = vpack.c.b16 %v578, %v576
    %v675 = vpack.c.b16 %v579, %v577
    %v676 = vpack.c.b16 %v582, %v580
    %v677 = vpack.c.b16 %v583, %v581
    %v678 = vpack.c.b16 %v586, %v584
    %v679 = vpack.c.b16 %v587, %v585
    %v680 = vpack.c.b16 %v590, %v588
    %v681 = vpack.c.b16 %v591, %v589
    %v682 = vpack.c.b16 %v594, %v592
    %v683 = vpack.c.b16 %v595, %v593
    %v684 = vpack.c.b16 %v598, %v596
    %v685 = vpack.c.b16 %v599, %v597
    %v686 = vpack.c.b16 %v602, %v600
    %v687 = vpack.c.b16 %v603, %v601
    %v688 = vpack.c.b16 %v606, %v604
    %v689 = vpack.c.b16 %v607, %v605
    %v690 = vpack.c.b16 %v610, %v608
    %v691 = vpack.c.b16 %v611, %v609
    %v692 = vpack.c.b16 %v614, %v612
    %v693 = vpack.c.b16 %v615, %v613
    %v694 = vpack.c.b16 %v618, %v616
    %v695 = vpack.c.b16 %v619, %v617
    %v696 = vpack.c.b16 %v622, %v620
    %v697 = vpack.c.b16 %v623, %v621
    %v698 = vpack.c.b16 %v626, %v624
    %v699 = vpack.c.b16 %v627, %v625
    %v700 = vpack.c.b16 %v630, %v628
    %v701 = vpack.c.b16 %v631, %v629
    %v702 = vpack.c.b16 %v634, %v632
    %v703 = vpack.c.b16 %v635, %v633
    %v704 = vpack.c.b16 %v638, %v636
    %v705 = vpack.c.b16 %v639, %v637
    %v706 = vpack.c.b16 %v642, %v640
    %v707 = vpack.c.b16 %v643, %v641
    %772 = vmatprep.subr.bf16.mxu0 %v645
    %773 = vmatpush1.bf16.msra.mxu0 %v644
    %774 = vmatprep.subr.bf16.mxu0 %v647
    %775 = vmatpush1.bf16.msra.mxu0 %v646
    %776 = vmatprep.subr.bf16.mxu0 %v649
    %777 = vmatpush1.bf16.msra.mxu0 %v648
    %778 = vmatprep.subr.bf16.mxu0 %v651
    %779 = vmatpush1.bf16.msra.mxu0 %v650
    %780 = vmatprep.subr.bf16.mxu0 %v653
    %781 = vmatpush1.bf16.msra.mxu0 %v652
    %782 = vmatprep.subr.bf16.mxu0 %v655
    %783 = vmatpush1.bf16.msra.mxu0 %v654
    %784 = vmatprep.subr.bf16.mxu0 %v657
    %785 = vmatpush1.bf16.msra.mxu0 %v656
    %786 = vmatprep.subr.bf16.mxu0 %v659
    %787 = vmatpush1.bf16.msra.mxu0 %v658
    %788 = vmatprep.subr.bf16.mxu0 %v661
    %789 = vmatpush1.bf16.msra.mxu0 %v660
    %790 = vmatprep.subr.bf16.mxu0 %v663
    %791 = vmatpush1.bf16.msra.mxu0 %v662
    %792 = vmatprep.subr.bf16.mxu0 %v665
    %793 = vmatpush1.bf16.msra.mxu0 %v664
    %794 = vmatprep.subr.bf16.mxu0 %v667
    %795 = vmatpush1.bf16.msra.mxu0 %v666
    %796 = vmatprep.subr.bf16.mxu0 %v669
    %797 = vmatpush1.bf16.msra.mxu0 %v668
    %798 = vmatprep.subr.bf16.mxu0 %v671
    %799 = vmatpush1.bf16.msra.mxu0 %v670
    %800 = vmatprep.subr.bf16.mxu0 %v673
    %801 = vmatpush1.bf16.msra.mxu0 %v672
    %802 = vmatprep.subr.bf16.mxu0 %v675
    %803 = vmatpush1.bf16.msra.mxu0 %v674
    %804 = vmatprep.mubr.bf16.mxu0 %v374
    %805 = vmatmul.mubr.bf16.gmra.mrb[0].mxu0 %v373
    %v806 = vpop.f32.mrb[0].mxu0
    %v807 = vadd.f32 %v445, %v806
    %v808 = vpop.f32.mrb[0].mxu0
    %v809 = vadd.f32 %v449, %v808
    %v810 = vpop.f32.mrb[0].mxu0
    %v811 = vpop.f32.mrb[0].mxu0
    %812 = vdwg.mxu0
    %813 = vmatprep.subr.bf16.mxu0 %v677
    %814 = vmatpush1.bf16.msra.mxu0 %v676
    %815 = vmatprep.subr.bf16.mxu0 %v679
    %816 = vmatpush1.bf16.msra.mxu0 %v678
    %817 = vmatprep.subr.bf16.mxu0 %v681
    %818 = vmatpush1.bf16.msra.mxu0 %v680
    %819 = vmatprep.subr.bf16.mxu0 %v683
    %820 = vmatpush1.bf16.msra.mxu0 %v682
    %821 = vmatprep.subr.bf16.mxu0 %v685
    %822 = vmatpush1.bf16.msra.mxu0 %v684
    %823 = vmatprep.subr.bf16.mxu0 %v687
    %824 = vmatpush1.bf16.msra.mxu0 %v686
    %825 = vmatprep.subr.bf16.mxu0 %v689
    %826 = vmatpush1.bf16.msra.mxu0 %v688
    %827 = vmatprep.subr.bf16.mxu0 %v691
    %828 = vmatpush1.bf16.msra.mxu0 %v690
    %829 = vmatprep.subr.bf16.mxu0 %v693
    %830 = vmatpush1.bf16.msra.mxu0 %v692
    %831 = vmatprep.subr.bf16.mxu0 %v695
    %832 = vmatpush1.bf16.msra.mxu0 %v694
    %833 = vmatprep.subr.bf16.mxu0 %v697
    %834 = vmatpush1.bf16.msra.mxu0 %v696
    %835 = vmatprep.subr.bf16.mxu0 %v699
    %836 = vmatpush1.bf16.msra.mxu0 %v698
    %837 = vmatprep.subr.bf16.mxu0 %v701
    %838 = vmatpush1.bf16.msra.mxu0 %v700
    %839 = vmatprep.subr.bf16.mxu0 %v703
    %840 = vmatpush1.bf16.msra.mxu0 %v702
    %841 = vmatprep.subr.bf16.mxu0 %v705
    %842 = vmatpush1.bf16.msra.mxu0 %v704
    %843 = vmatprep.subr.bf16.mxu0 %v707
    %844 = vmatpush1.bf16.msra.mxu0 %v706
    %845 = vmatprep.mubr.bf16.mxu0 %v376
    %846 = vmatmul.mubr.bf16.gmra.mrb[0].mxu0 %v375
    %v847 = vpop.f32.mrb[0].mxu0
    %v848 = vadd.f32 %v807, %v847
    %v849 = vpop.f32.mrb[0].mxu0
    %v850 = vadd.f32 %v809, %v849
    %v851 = vpop.f32.mrb[0].mxu0
    %v852 = vpop.f32.mrb[0].mxu0
    %853 = vdwg.mxu0
    %v854 = vmax.f32 %v848, 0.0
    %v855 = vmax.f32 %v850, 0.0
    %v856 = vpack.c.bf16 %v854, %v854
    %v857 = vpack.c.bf16 %v855, %v855
    %v858 = vld [vmem:[#allocation10] sm:$0xf]
    %v859 = vld [vmem:[#allocation10 + $0x4] sm:$0xf]
    %v860 = vld [vmem:[#allocation10 + $0x8] sm:$0xf]
    %v861 = vld [vmem:[#allocation10 + $0xc] sm:$0xf]
    %v862 = vld [vmem:[#allocation10 + $0x10] sm:$0xf]
    %v863 = vld [vmem:[#allocation10 + $0x14] sm:$0xf]
    %v864 = vld [vmem:[#allocation10 + $0x18] sm:$0xf]
    %v865 = vld [vmem:[#allocation10 + $0x1c] sm:$0xf]
    %v866 = vld [vmem:[#allocation10 + $0x20] sm:$0xf]
    %v867 = vld [vmem:[#allocation10 + $0x24] sm:$0xf]
    %v868 = vld [vmem:[#allocation10 + $0x28] sm:$0xf]
    %v869 = vld [vmem:[#allocation10 + $0x2c] sm:$0xf]
    %v870 = vld [vmem:[#allocation10 + $0x30] sm:$0xf]
    %v871 = vld [vmem:[#allocation10 + $0x34] sm:$0xf]
    %v872 = vld [vmem:[#allocation10 + $0x38] sm:$0xf]
    %v873 = vld [vmem:[#allocation10 + $0x3c] sm:$0xf]
    %v874 = vld [vmem:[#allocation10 + $0x40] sm:$0xf]
    %v875 = vld [vmem:[#allocation10 + $0x44] sm:$0xf]
    %v876 = vld [vmem:[#allocation10 + $0x48] sm:$0xf]
    %v877 = vld [vmem:[#allocation10 + $0x4c] sm:$0xf]
    %v878 = vld [vmem:[#allocation10 + $0x50] sm:$0xf]
    %v879 = vld [vmem:[#allocation10 + $0x54] sm:$0xf]
    %v880 = vld [vmem:[#allocation10 + $0x58] sm:$0xf]
    %v881 = vld [vmem:[#allocation10 + $0x5c] sm:$0xf]
    %v882 = vld [vmem:[#allocation10 + $0x60] sm:$0xf]
    %v883 = vld [vmem:[#allocation10 + $0x64] sm:$0xf]
    %v884 = vld [vmem:[#allocation10 + $0x68] sm:$0xf]
    %v885 = vld [vmem:[#allocation10 + $0x6c] sm:$0xf]
    %v886 = vld [vmem:[#allocation10 + $0x70] sm:$0xf]
    %v887 = vld [vmem:[#allocation10 + $0x74] sm:$0xf]
    %v888 = vld [vmem:[#allocation10 + $0x78] sm:$0xf]
    %v889 = vld [vmem:[#allocation10 + $0x7c] sm:$0xf]
    %v891 = vlaneseq
    %v892 = vshrl.u32 %v891, 7
    %v893 = vsub.s32 0, %v892
    %v894 = vrot.slane %v89, %v893
    %v928 = vunpack.c.l.b16 %v858
    %v929 = vunpack.c.l.b16 %v859
    %v930 = vunpack.c.l.b16 %v860
    %v931 = vunpack.c.l.b16 %v861
    %v932 = vunpack.c.l.b16 %v862
    %v933 = vunpack.c.l.b16 %v863
    %v934 = vunpack.c.l.b16 %v864
    %v935 = vunpack.c.l.b16 %v865
    %v936 = vunpack.c.l.b16 %v866
    %v937 = vunpack.c.l.b16 %v867
    %v938 = vunpack.c.l.b16 %v868
    %v939 = vunpack.c.l.b16 %v869
    %v940 = vunpack.c.l.b16 %v870
    %v941 = vunpack.c.l.b16 %v871
    %v942 = vunpack.c.l.b16 %v872
    %v943 = vunpack.c.l.b16 %v873
    %v944 = vunpack.c.l.b16 %v874
    %v945 = vunpack.c.l.b16 %v875
    %v946 = vunpack.c.l.b16 %v876
    %v947 = vunpack.c.l.b16 %v877
    %v948 = vunpack.c.l.b16 %v878
    %v949 = vunpack.c.l.b16 %v879
    %v950 = vunpack.c.l.b16 %v880
    %v951 = vunpack.c.l.b16 %v881
    %v952 = vunpack.c.l.b16 %v882
    %v953 = vunpack.c.l.b16 %v883
    %v954 = vunpack.c.l.b16 %v884
    %v955 = vunpack.c.l.b16 %v885
    %v956 = vunpack.c.l.b16 %v886
    %v957 = vunpack.c.l.b16 %v887
    %v958 = vunpack.c.l.b16 %v888
    %v959 = vunpack.c.l.b16 %v889
    %v960 = vpack.c.b16 %v929, %v928
    %v961 = vpack.c.b16 %v931, %v930
    %v962 = vpack.c.b16 %v933, %v932
    %v963 = vpack.c.b16 %v935, %v934
    %v964 = vpack.c.b16 %v937, %v936
    %v965 = vpack.c.b16 %v939, %v938
    %v966 = vpack.c.b16 %v941, %v940
    %v967 = vpack.c.b16 %v943, %v942
    %v968 = vpack.c.b16 %v945, %v944
    %v969 = vpack.c.b16 %v947, %v946
    %v970 = vpack.c.b16 %v949, %v948
    %v971 = vpack.c.b16 %v951, %v950
    %v972 = vpack.c.b16 %v953, %v952
    %v973 = vpack.c.b16 %v955, %v954
    %v974 = vpack.c.b16 %v957, %v956
    %v975 = vpack.c.b16 %v959, %v958
    %992 = vmatprep.subr.bf16.mxu0 0
    %993 = vmatpush1.bf16.msra.mxu0 %v960
    %994 = vmatprep.subr.bf16.mxu0 0
    %995 = vmatpush1.bf16.msra.mxu0 %v961
    %996 = vmatprep.subr.bf16.mxu0 0
    %997 = vmatpush1.bf16.msra.mxu0 %v962
    %998 = vmatprep.subr.bf16.mxu0 0
    %999 = vmatpush1.bf16.msra.mxu0 %v963
    %1000 = vmatprep.subr.bf16.mxu0 0
    %1001 = vmatpush1.bf16.msra.mxu0 %v964
    %1002 = vmatprep.subr.bf16.mxu0 0
    %1003 = vmatpush1.bf16.msra.mxu0 %v965
    %1004 = vmatprep.subr.bf16.mxu0 0
    %1005 = vmatpush1.bf16.msra.mxu0 %v966
    %1006 = vmatprep.subr.bf16.mxu0 0
    %1007 = vmatpush1.bf16.msra.mxu0 %v967
    %1008 = vmatprep.subr.bf16.mxu0 0
    %1009 = vmatpush1.bf16.msra.mxu0 %v968
    %1010 = vmatprep.subr.bf16.mxu0 0
    %1011 = vmatpush1.bf16.msra.mxu0 %v969
    %1012 = vmatprep.subr.bf16.mxu0 0
    %1013 = vmatpush1.bf16.msra.mxu0 %v970
    %1014 = vmatprep.subr.bf16.mxu0 0
    %1015 = vmatpush1.bf16.msra.mxu0 %v971
    %1016 = vmatprep.subr.bf16.mxu0 0
    %1017 = vmatpush1.bf16.msra.mxu0 %v972
    %1018 = vmatprep.subr.bf16.mxu0 0
    %1019 = vmatpush1.bf16.msra.mxu0 %v973
    %1020 = vmatprep.subr.bf16.mxu0 0
    %1021 = vmatpush1.bf16.msra.mxu0 %v974
    %1022 = vmatprep.subr.bf16.mxu0 0
    %1023 = vmatpush1.bf16.msra.mxu0 %v975
    %1024 = vmatprep.mubr.bf16.mxu0 %v857
    %1025 = vmatmul.mubr.bf16.gmra.mrb[0].mxu0 %v856
    %v1026 = vpop.f32.mrb[0].mxu0
    %v1027 = vadd.f32 %v894, %v1026
    %v1028 = vpop.f32.mrb[0].mxu0
    %v1029 = vpop.f32.mrb[0].mxu0
    %v1030 = vpop.f32.mrb[0].mxu0
    %1031 = vdwg.mxu0
    %v1032 = vtanh.pop %v1027
    %1033 = vst [vmem:[#allocation11] sm:$0xff] %v1032
    // Predicated region
    $region42: #{actor_forward_padded.1} parent=1 // pred_check
      _
    $region43: #{actor_forward_padded.1} parent=1 // pred_check_branch
      %1035 = sbr.rel (0) target = $region45
    $region44: #{actor_forward_padded.1} parent=1 // pred_region
      %s1037 = ssub.s32 128, 128
      %1038 = vsyncadd [#allocation4], %s1037
      %s1040 = sshll.u32 [#allocation11], 4
      %s1041 = int_to_ptr.vmem [resolvable:$true] %s1040
      %1043 = dma.vmem_to_hbm [thread:$0]  %s1041, 128, %s5, [#allocation4]
    $region45: #{actor_forward_padded.1} parent=1 // pred_fallthru
      _
    // Predicated region
    $region46: #{actor_forward_padded.1} parent=1 // pred_check
      _
    $region47: #{actor_forward_padded.1} parent=1 // pred_check_branch
      %1045 = sbr.rel (0) target = $region49
    $region48: #{actor_forward_padded.1} parent=1 // pred_region
      %1046 = dma.done [#allocation4], 128
    $region49: #{actor_forward_padded.1} parent=1 // pred_fallthru
      _
    %1047 = vsyncpa [#allocation3], 1
    %1048 = vsyncpa [#allocation6], 1
    %1049 = vsyncpa [#allocation9], 1
    %1050 = vsyncpa [#allocation4], 1

</llo_original>
